<compile_context>
chip_gen: v5e
topology: v5e:2x2
jax: 0.10.0
libtpu: 0.0.40
codegen_flags: <defaults>
</compile_context>

<pallas_src>
import functools

import jax
import jax.numpy as jnp
from jax.experimental import pallas as pl
from jax.experimental.pallas import tpu as pltpu


def _round_up(x, m):
    return ((x + m - 1) // m) * m


def mlp_kernel(x_ref, wfc_t_ref, wproj_t_ref, o_ref, acc_ref):
    # x_ref:       (tm, dim)    row tile of flattened activations
    # wfc_t_ref:   (dim, tk)    hidden-slice of c_fc weight (transposed)
    # wproj_t_ref: (tk, dim)    hidden-slice of c_proj weight (transposed)
    # o_ref:       (tm, dim)
    # acc_ref:     (tm, dim)    f32 accumulator, resident across the k axis
    k = pl.program_id(1)

    @pl.when(k == 0)
    def _():
        acc_ref[...] = jnp.zeros_like(acc_ref)

    # First matmul on the MXU with f32 accumulation.
    h = jnp.dot(x_ref[...], wfc_t_ref[...], preferred_element_type=jnp.float32)
    # relu(.)^2 elementwise in f32 (VPU).  The hidden dim is purely
    # elementwise here, so tiling it across the grid is exact.
    h = jnp.maximum(h, 0.0)
    h = h * h
    # Second matmul: accumulate this hidden slice's contribution to the output.
    acc_ref[...] += jnp.dot(
        h.astype(wproj_t_ref.dtype), wproj_t_ref[...],
        preferred_element_type=jnp.float32)

    @pl.when(k == pl.num_programs(1) - 1)
    def _():
        o_ref[...] = acc_ref[...].astype(o_ref.dtype)


def prepare_mlp_weights(w_fc, w_proj, compute_dtype=None):
    """One-time weight prep: transpose (and optionally cast to bf16 for the MXU).

    w_fc:   (4*dim, dim)  -> returns W_fc.T   (dim, 4*dim)
    w_proj: (dim, 4*dim)  -> returns W_proj.T (4*dim, dim)
    """
    wfc_t = jnp.asarray(w_fc).T
    wproj_t = jnp.asarray(w_proj).T
    if compute_dtype is not None:
        wfc_t = wfc_t.astype(compute_dtype)
        wproj_t = wproj_t.astype(compute_dtype)
    return wfc_t, wproj_t


@functools.partial(jax.jit, static_argnames=("tm", "tk", "compute_dtype"))
def mlp_forward(x, wfc_t, wproj_t, *, tm=256, tk=512, compute_dtype=None):
    """x: [..., dim]; wfc_t: [dim, 4*dim]; wproj_t: [4*dim, dim] (pre-transposed)."""
    orig_shape = x.shape
    out_dtype = x.dtype
    dim = orig_shape[-1]
    hidden = wfc_t.shape[1]
    assert wfc_t.shape == (dim, hidden), wfc_t.shape
    assert wproj_t.shape == (hidden, dim), wproj_t.shape

    if compute_dtype is not None:
        x = x.astype(compute_dtype)

    x2d = x.reshape(-1, dim)
    n = x2d.shape[0]

    # Row tile: large (feeds the MXU, amortizes per-step overhead), multiple of
    # 8 sublanes, no larger than the padded row count.  Pad rows with zeros
    # instead of asserting divisibility.
    tm_eff = min(_round_up(tm, 8), _round_up(n, 8))
    n_pad = _round_up(n, tm_eff)
    if n_pad != n:
        x2d = jnp.pad(x2d, ((0, n_pad - n), (0, 0)))

    # Hidden tile: must divide hidden and be 128-lane aligned (or full hidden).
    tk_eff = min(tk, hidden)
    if hidden % tk_eff != 0 or (tk_eff % 128 != 0 and tk_eff != hidden):
        tk_eff = hidden

    grid = (n_pad // tm_eff, hidden // tk_eff)

    bytes_accessed = int(
        x2d.size * x2d.dtype.itemsize
        + n_pad * dim * jnp.dtype(out_dtype).itemsize
        + wfc_t.size * wfc_t.dtype.itemsize
        + wproj_t.size * wproj_t.dtype.itemsize)
    cost = pl.CostEstimate(
        flops=4 * n_pad * dim * hidden,   # two matmuls: 2*N*dim*hidden each
        transcendentals=0,
        bytes_accessed=bytes_accessed)

    out2d = pl.pallas_call(
        mlp_kernel,
        out_shape=jax.ShapeDtypeStruct((n_pad, dim), out_dtype),
        grid_spec=pltpu.PrefetchScalarGridSpec(
            num_scalar_prefetch=0,
            grid=grid,
            in_specs=[
                pl.BlockSpec((tm_eff, dim), lambda i, k: (i, 0)),
                pl.BlockSpec((dim, tk_eff), lambda i, k: (0, k)),
                pl.BlockSpec((tk_eff, dim), lambda i, k: (k, 0)),
            ],
            out_specs=pl.BlockSpec((tm_eff, dim), lambda i, k: (i, 0)),
            scratch_shapes=[pltpu.VMEM((tm_eff, dim), jnp.float32)],
        ),
        compiler_params=pltpu.CompilerParams(
            dimension_semantics=("parallel", "arbitrary")),
        cost_estimate=cost,
    )(x2d, wfc_t, wproj_t)

    if n_pad != n:
        out2d = out2d[:n]
    return out2d.reshape(orig_shape)


def init_mlp_params(key, dim, dtype=jnp.float32):
    """Match MLP.__init__ / CastedLinear.reset_parameters exactly."""
    hidden = 4 * dim
    std = 0.5 * dim ** (-0.5)
    bound = (3.0 ** 0.5) * std
    # c_fc: uniform(-bound, bound), shape (out_features, in_features) = (4*dim, dim)
    w_fc = jax.random.uniform(key, (hidden, dim), dtype=dtype,
                              minval=-bound, maxval=bound)
    # c_proj: zero-initialized, shape (dim, 4*dim)
    w_proj = jnp.zeros((dim, hidden), dtype=dtype)
    return w_fc, w_proj


def mlp_reference(x, w_fc, w_proj):
    h = x @ w_fc.T
    h = jnp.square(jnp.maximum(h, 0.0))
    return h @ w_proj.T


if __name__ == "__main__":
    key = jax.random.PRNGKey(0)
    k_w, k_x, k_p = jax.random.split(key, 3)

    # Small shapes consistent with the module: dim=32 -> hidden=128.
    B, T, dim = 2, 8, 32
    hidden = 4 * dim
    w_fc, _w_proj_zero = init_mlp_params(k_w, dim)
    # Non-trivial projection weights so the result isn't trivially zero
    # (the module zero-inits c_proj; semantics are identical either way).
    w_proj = jax.random.normal(k_p, (dim, hidden), dtype=jnp.float32) * 0.02
    x = jax.random.normal(k_x, (B, T, dim), dtype=jnp.float32)
    ref = mlp_reference(x, w_fc, w_proj)

    # (1) f32 path, hidden-tile grid axis exercised (tk=128 -> 1 hidden step here).
    wfc_t, wproj_t = prepare_mlp_weights(w_fc, w_proj)
    out = jax.block_until_ready(mlp_forward(x, wfc_t, wproj_t, tk=128))
    assert out.shape == x.shape
    assert jnp.allclose(out, ref, atol=2e-2, rtol=2e-2)

    # (2) bf16 compute path (MXU-native) with f32 accumulation; looser tolerance.
    wfc_t_bf, wproj_t_bf = prepare_mlp_weights(w_fc, w_proj,
                                               compute_dtype=jnp.bfloat16)
    out_bf = jax.block_until_ready(
        mlp_forward(x, wfc_t_bf, wproj_t_bf, compute_dtype=jnp.bfloat16))
    assert jnp.allclose(out_bf, ref, atol=5e-2, rtol=5e-2)

    # (3) Larger shape with a row count that is NOT a multiple of tm
    #     (exercises zero-padding + multi-tile row/hidden grid + accumulation).
    B2, T2, dim2 = 3, 100, 128          # n = 300 rows, hidden = 512
    w_fc2, _ = init_mlp_params(k_w, dim2)
    w_proj2 = jax.random.normal(k_p, (dim2, 4 * dim2), dtype=jnp.float32) * 0.02
    x2 = jax.random.normal(k_x, (B2, T2, dim2), dtype=jnp.float32)
    wfc_t2, wproj_t2 = prepare_mlp_weights(w_fc2, w_proj2)
    out2 = jax.block_until_ready(mlp_forward(x2, wfc_t2, wproj_t2, tm=256, tk=128))
    ref2 = mlp_reference(x2, w_fc2, w_proj2)
    assert out2.shape == x2.shape
    assert jnp.allclose(out2, ref2, atol=2e-2, rtol=2e-2)

    print("KERNEL_OK")
</pallas_src>

<mosaic_0001>
module attributes {stable_mosaic.version = 11 : i64} {
  func.func @mlp_kernel(%arg0: i32, %arg1: i32, %arg2: memref<16x32xf32, #tpu.memory_space<vmem>>, %arg3: memref<32x128xf32, #tpu.memory_space<vmem>>, %arg4: memref<128x32xf32, #tpu.memory_space<vmem>>, %arg5: memref<16x32xf32, #tpu.memory_space<vmem>>, %arg6: memref<16x32xf32, #tpu.memory_space<vmem>>) attributes {dimension_semantics = [#tpu.dimension_semantics<parallel>, #tpu.dimension_semantics<arbitrary>], iteration_bounds = array<i64: 1, 1>, scalar_prefetch = 0 : i64, scratch_operands = 1 : i64, tpu.core_type = #tpu.core_type<tc>, window_params = [{transform_indices = @transform_0, window_bounds = array<i64: 16, 32>}, {transform_indices = @transform_1, window_bounds = array<i64: 32, 128>}, {transform_indices = @transform_2, window_bounds = array<i64: 128, 32>}, {transform_indices = @transform_3, window_bounds = array<i64: 16, 32>}]} {
    %c0_i32 = arith.constant 0 : i32
    %0 = arith.cmpi eq, %arg1, %c0_i32 : i32
    %1 = arith.extui %0 : i1 to i32
    %c0_i32_0 = arith.constant 0 : i32
    %2 = arith.cmpi ne, %1, %c0_i32_0 : i32
    scf.if %2 {
      %cst_14 = arith.constant 0.000000e+00 : f32
      %17 = vector.broadcast %cst_14 : f32 to vector<16x32xf32>
      %c0_15 = arith.constant 0 : index
      %c0_16 = arith.constant 0 : index
      %18 = vector.load %arg6[%c0_15, %c0_16] : memref<16x32xf32, #tpu.memory_space<vmem>>, vector<16x32xf32>
      tpu.vector_store %arg6[%c0_15, %c0_16], %17 {strides = array<i32>} : memref<16x32xf32, #tpu.memory_space<vmem>>, vector<16x32xf32>,
    } else {
    }
    %c0 = arith.constant 0 : index
    %c0_1 = arith.constant 0 : index
    %3 = vector.load %arg2[%c0, %c0_1] : memref<16x32xf32, #tpu.memory_space<vmem>>, vector<16x32xf32>
    %c0_2 = arith.constant 0 : index
    %c0_3 = arith.constant 0 : index
    %4 = vector.load %arg3[%c0_2, %c0_3] : memref<32x128xf32, #tpu.memory_space<vmem>>, vector<32x128xf32>
    %cst = arith.constant dense<0.000000e+00> : vector<16x128xf32>
    %5 = tpu.matmul %3, %4, %cst {dimension_numbers = #tpu.dot_dimension_numbers<[1], [0], [0], [1], [0, 0, 1, 1], [], []>} : vector<16x32xf32>, vector<32x128xf32>, vector<16x128xf32> -> vector<16x128xf32>
    %cst_4 = arith.constant 0.000000e+00 : f32
    %6 = vector.broadcast %cst_4 : f32 to vector<16x128xf32>
    %7 = arith.maximumf %5, %6 : vector<16x128xf32>
    %8 = arith.mulf %7, %7 : vector<16x128xf32>
    %c0_5 = arith.constant 0 : index
    %c0_6 = arith.constant 0 : index
    %9 = vector.load %arg6[%c0_5, %c0_6] : memref<16x32xf32, #tpu.memory_space<vmem>>, vector<16x32xf32>
    %c0_7 = arith.constant 0 : index
    %c0_8 = arith.constant 0 : index
    %10 = vector.load %arg4[%c0_7, %c0_8] : memref<128x32xf32, #tpu.memory_space<vmem>>, vector<128x32xf32>
    %cst_9 = arith.constant dense<0.000000e+00> : vector<16x32xf32>
    %11 = tpu.matmul %8, %10, %cst_9 {dimension_numbers = #tpu.dot_dimension_numbers<[1], [0], [0], [1], [0, 0, 1, 1], [], []>} : vector<16x128xf32>, vector<128x32xf32>, vector<16x32xf32> -> vector<16x32xf32>
    %12 = arith.addf %9, %11 : vector<16x32xf32>
    %c0_10 = arith.constant 0 : index
    %c0_11 = arith.constant 0 : index
    %13 = vector.load %arg6[%c0_10, %c0_11] : memref<16x32xf32, #tpu.memory_space<vmem>>, vector<16x32xf32>
    tpu.vector_store %arg6[%c0_10, %c0_11], %12 {strides = array<i32>} : memref<16x32xf32, #tpu.memory_space<vmem>>, vector<16x32xf32>,
    %c0_i32_12 = arith.constant 0 : i32
    %14 = arith.cmpi eq, %arg1, %c0_i32_12 : i32
    %15 = arith.extui %14 : i1 to i32
    %c0_i32_13 = arith.constant 0 : i32
    %16 = arith.cmpi ne, %15, %c0_i32_13 : i32
    scf.if %16 {
      %c0_14 = arith.constant 0 : index
      %c0_15 = arith.constant 0 : index
      %17 = vector.load %arg6[%c0_14, %c0_15] : memref<16x32xf32, #tpu.memory_space<vmem>>, vector<16x32xf32>
      %c0_16 = arith.constant 0 : index
      %c0_17 = arith.constant 0 : index
      %18 = vector.load %arg5[%c0_16, %c0_17] : memref<16x32xf32, #tpu.memory_space<vmem>>, vector<16x32xf32>
      tpu.vector_store %arg5[%c0_16, %c0_17], %17 {strides = array<i32>} : memref<16x32xf32, #tpu.memory_space<vmem>>, vector<16x32xf32>,
    } else {
    }
    return
  }
  func.func @transform_0(%arg0: i32, %arg1: i32) -> (i32, i32) {
    %c0_i32 = arith.constant 0 : i32
    %c0_i32_0 = arith.constant 0 : i32
    return %arg0, %c0_i32 : i32, i32
  }
  func.func @transform_1(%arg0: i32, %arg1: i32) -> (i32, i32) {
    %c0_i32 = arith.constant 0 : i32
    %c0_i32_0 = arith.constant 0 : i32
    return %c0_i32, %arg1 : i32, i32
  }
  func.func @transform_2(%arg0: i32, %arg1: i32) -> (i32, i32) {
    %c0_i32 = arith.constant 0 : i32
    %c0_i32_0 = arith.constant 0 : i32
    return %arg1, %c0_i32 : i32, i32
  }
  func.func @transform_3(%arg0: i32, %arg1: i32) -> (i32, i32) {
    %c0_i32 = arith.constant 0 : i32
    %c0_i32_0 = arith.constant 0 : i32
    return %arg0, %c0_i32 : i32, i32
  }
}

</mosaic_0001>

<llo_original>
// kernel: mlp_forward.1
$region0: #{mlp_forward.1}
  #allocation0 [shape = 'u32[]', space=smem, size = 0x4, offset = 0x4, fixed_abs, tag = 'smem constant byte address 0x4 - core index']
  #allocation1 [shape = 'u32[72,128]{1,0:T(1,128)}', space=vmem, size = 0x9000, scoped, tag = 'internal scratch']
  #allocation2 [shape = 'f32[16,32]{1,0:T(8,128)}', space=vmem, size = 0x2000, scoped, tag = 'scratch operand']
  %s0 = inlined_call_operand.vmem [shape: f32[16,32], index: 0, kind: input, shape index: {}]
  %s1 = inlined_call_operand.vmem [shape: f32[32,128], index: 1, kind: input, shape index: {}]
  %s2 = inlined_call_operand.vmem [shape: f32[128,32], index: 2, kind: input, shape index: {}]
  %s3 = inlined_call_operand.hbm [shape: f32[16,32], index: 3, kind: output, shape index: {}]
  %s4 = sld [smem:[#allocation0]]
  $region30: #{mlp_forward.1} parent=0
    _
  %s6 = ssub.s32 1, %s4
  %s7 = scalar_select 0, %s6, %s4
  $region1: #{mlp_forward.1} parent=0
    #allocation3 [shape = 'u8[8192]{0}', space=vmem, size = 0x2000, scoped, tag = 'output window, operand 0, single buffered']
    #allocation4 [shape = 's32[1]{0}', space=sflag, size = 0x4, scoped, tag = 'scoped memory for mlp_forward.1']
    %8 = vsyncpa [#allocation4], 0
    // Predicated region
    $region2: #{mlp_forward.1} parent=1 // pred_check
      _
    $region3: #{mlp_forward.1} parent=1 // pred_check_branch
      %10 = sbr.rel (0) target = $region5
    $region4: #{mlp_forward.1} parent=1 // pred_region
      _
    $region5: #{mlp_forward.1} parent=1 // pred_fallthru
      _
    // Predicated region
    $region6: #{mlp_forward.1} parent=1 // pred_check
      _
    $region7: #{mlp_forward.1} parent=1 // pred_check_branch
      %12 = sbr.rel (0) target = $region9
    $region8: #{mlp_forward.1} parent=1 // pred_region
      _
    $region9: #{mlp_forward.1} parent=1 // pred_fallthru
      _
    // Predicated region
    $region10: #{mlp_forward.1} parent=1 // pred_check
      _
    $region11: #{mlp_forward.1} parent=1 // pred_check_branch
      %14 = sbr.rel (0) target = $region13
    $region12: #{mlp_forward.1} parent=1 // pred_region
      _
    $region13: #{mlp_forward.1} parent=1 // pred_fallthru
      _
    %p15 = scmp.eq.s32.totalorder 0, 0
    // Predicated region
    $region14: #{mlp_forward.1} parent=1 // pred_check
      %p16 = pneg %p15
    $region15: #{mlp_forward.1} parent=1 // pred_check_branch
      %18 = sbr.rel (%p16) target = $region17
    $region16: #{mlp_forward.1} parent=1 // pred_region
      %vm19 = vcmask 261120
      %20 = vst.msk [vmem:[#allocation2] sm:$0xff] %vm19, 0.0
      %21 = vst.msk [vmem:[#allocation2 + $0x8] sm:$0xff] %vm19, 0.0
    $region17: #{mlp_forward.1} parent=1 // pred_fallthru
      _
    %v22 = vld [vmem:[%s0] sm:$0xff]
    %v23 = vld [vmem:[%s0 + $0x8] sm:$0xff]
    %v24 = vld [vmem:[%s1] sm:$0xff]
    %v25 = vld [vmem:[%s1 + $0x8] sm:$0xff]
    %v26 = vld [vmem:[%s1 + $0x10] sm:$0xff]
    %v27 = vld [vmem:[%s1 + $0x18] sm:$0xff]
    %vm28 = vcmask 261120
    %v30 = vsel %vm28, %v22, 0
    %v33 = vsel %vm28, %v23, 0
    %35 = vmatpush.msra.mxu0 0.0
    %36 = vmatpush.msra.mxu0 0.0
    %37 = vmatpush.msra.mxu0 0.0
    %38 = vmatpush.msra.mxu0 0.0
    %39 = vmatpush.msra.mxu0 0.0
    %40 = vmatpush.msra.mxu0 0.0
    %41 = vmatpush.msra.mxu0 0.0
    %42 = vmatpush.msra.mxu0 0.0
    %43 = vmatpush.msra.mxu0 0.0
    %44 = vmatpush.msra.mxu0 0.0
    %45 = vmatpush.msra.mxu0 0.0
    %46 = vmatpush.msra.mxu0 0.0
    %47 = vmatpush.msra.mxu0 %v27
    %48 = vmatpush.msra.mxu0 %v26
    %49 = vmatpush.msra.mxu0 %v25
    %50 = vmatpush.msra.mxu0 %v24
    %51 = vmatmul.f32.gmra.mxu0 %v30
    %v52 = vpop.f32.mrf.mxu0
    %v53 = vadd.f32 0.0, %v52
    %54 = vmatmul.f32.gmra.mxu0 %v33
    %v55 = vpop.f32.mrf.mxu0
    %v56 = vadd.f32 0.0, %v55
    %57 = vdwg.mxu0
    %v58 = vmax.f32 %v53, 0.0
    %v59 = vmax.f32 %v56, 0.0
    %v60 = vmul.f32 %v58, %v58
    %v61 = vmul.f32 %v59, %v59
    %v62 = vld [vmem:[#allocation2] sm:$0xff]
    %v63 = vld [vmem:[#allocation2 + $0x8] sm:$0xff]
    %v64 = vld [vmem:[%s2] sm:$0xff]
    %v65 = vld [vmem:[%s2 + $0x8] sm:$0xff]
    %v66 = vld [vmem:[%s2 + $0x10] sm:$0xff]
    %v67 = vld [vmem:[%s2 + $0x18] sm:$0xff]
    %v68 = vld [vmem:[%s2 + $0x20] sm:$0xff]
    %v69 = vld [vmem:[%s2 + $0x28] sm:$0xff]
    %v70 = vld [vmem:[%s2 + $0x30] sm:$0xff]
    %v71 = vld [vmem:[%s2 + $0x38] sm:$0xff]
    %v72 = vld [vmem:[%s2 + $0x40] sm:$0xff]
    %v73 = vld [vmem:[%s2 + $0x48] sm:$0xff]
    %v74 = vld [vmem:[%s2 + $0x50] sm:$0xff]
    %v75 = vld [vmem:[%s2 + $0x58] sm:$0xff]
    %v76 = vld [vmem:[%s2 + $0x60] sm:$0xff]
    %v77 = vld [vmem:[%s2 + $0x68] sm:$0xff]
    %v78 = vld [vmem:[%s2 + $0x70] sm:$0xff]
    %v79 = vld [vmem:[%s2 + $0x78] sm:$0xff]
    %80 = vmatpush.msra.mxu0 %v79
    %81 = vmatpush.msra.mxu0 %v78
    %82 = vmatpush.msra.mxu0 %v77
    %83 = vmatpush.msra.mxu0 %v76
    %84 = vmatpush.msra.mxu0 %v75
    %85 = vmatpush.msra.mxu0 %v74
    %86 = vmatpush.msra.mxu0 %v73
    %87 = vmatpush.msra.mxu0 %v72
    %88 = vmatpush.msra.mxu0 %v71
    %89 = vmatpush.msra.mxu0 %v70
    %90 = vmatpush.msra.mxu0 %v69
    %91 = vmatpush.msra.mxu0 %v68
    %92 = vmatpush.msra.mxu0 %v67
    %93 = vmatpush.msra.mxu0 %v66
    %94 = vmatpush.msra.mxu0 %v65
    %95 = vmatpush.msra.mxu0 %v64
    %96 = vmatmul.f32.gmra.mxu0 %v60
    %v97 = vpop.f32.mrf.mxu0
    %v98 = vadd.f32 0.0, %v97
    %99 = vmatmul.f32.gmra.mxu0 %v61
    %v100 = vpop.f32.mrf.mxu0
    %v101 = vadd.f32 0.0, %v100
    %102 = vdwg.mxu0
    %v103 = vadd.f32 %v62, %v98
    %v104 = vadd.f32 %v63, %v101
    %105 = vst.msk [vmem:[#allocation2] sm:$0xff] %vm28, %v103
    %106 = vst.msk [vmem:[#allocation2 + $0x8] sm:$0xff] %vm28, %v104
    // Predicated region
    $region18: #{mlp_forward.1} parent=1 // pred_check
      %p107 = pneg %p15
    $region19: #{mlp_forward.1} parent=1 // pred_check_branch
      %109 = sbr.rel (%p107) target = $region21
    $region20: #{mlp_forward.1} parent=1 // pred_region
      %v110 = vld [vmem:[#allocation2] sm:$0xff]
      %v111 = vld [vmem:[#allocation2 + $0x8] sm:$0xff]
      %112 = vst.msk [vmem:[#allocation3] sm:$0xff] %vm28, %v110
      %113 = vst.msk [vmem:[#allocation3 + $0x8] sm:$0xff] %vm28, %v111
    $region21: #{mlp_forward.1} parent=1 // pred_fallthru
      _
    // Predicated region
    $region22: #{mlp_forward.1} parent=1 // pred_check
      _
    $region23: #{mlp_forward.1} parent=1 // pred_check_branch
      %115 = sbr.rel (0) target = $region25
    $region24: #{mlp_forward.1} parent=1 // pred_region
      %117 = vsyncadd [#allocation4], 0
      %s118 = sshll.u32 [#allocation3], 4
      %s119 = int_to_ptr.vmem [resolvable:$true] %s118
      %s120 = sshll.u32 %s3, 4
      %s121 = int_to_ptr.hbm [resolvable:$true] %s120
      %126 = dma.vmem_to_hbm [thread:$0]  %s119, 256, %s121, [#allocation4], 128, 128, 8
    $region25: #{mlp_forward.1} parent=1 // pred_fallthru
      _
    // Predicated region
    $region26: #{mlp_forward.1} parent=1 // pred_check
      _
    $region27: #{mlp_forward.1} parent=1 // pred_check_branch
      %128 = sbr.rel (0) target = $region29
    $region28: #{mlp_forward.1} parent=1 // pred_region
      %130 = dma.done [#allocation4], 256
    $region29: #{mlp_forward.1} parent=1 // pred_fallthru
      _
    %131 = vsyncpa [#allocation4], 1

</llo_original>
